<compile_context>
chip_gen: v6e
topology: v6e:2x2x1
jax: 0.10.0
libtpu: 0.0.40
codegen_flags: <defaults>
</compile_context>

<pallas_src>
import math
from functools import partial

import jax
import jax.numpy as jnp
from jax.experimental import pallas as pl
from jax.experimental.pallas import tpu as pltpu

TM = 128                               # matmul M (sublane) tile
TK_CANDIDATES = (512, 384, 256, 128)   # per-conv K tile (must divide Kpad)
TN_CANDIDATES = (256, 128)             # per-conv N tile (must divide Npad)
EPS = 1e-5                             # torch BatchNorm2d default eps


def _rup(x, m):
    return ((x + m - 1) // m) * m


def _pick_tile(dim, candidates):
    for c in candidates:
        if dim % c == 0:
            return c
    return candidates[-1]


def _padded_rows(m):
    # Pad M to 256 for larger (lower-overhead) elementwise tiles when the
    # matmul-padding waste stays small; otherwise the minimal 128.
    return _rup(m, 256) if m >= 1024 else _rup(m, 128)


# ----------------------------- Pallas kernels -------------------------------

def _matmul_kernel(a_ref, b_ref, o_ref, acc_ref):
    @pl.when(pl.program_id(2) == 0)
    def _():
        acc_ref[...] = jnp.zeros_like(acc_ref)

    acc_ref[...] += jnp.dot(a_ref[...], b_ref[...],
                            preferred_element_type=jnp.float32)

    @pl.when(pl.program_id(2) == pl.num_programs(2) - 1)
    def _():
        o_ref[...] = acc_ref[...].astype(o_ref.dtype)


def _matmul_bn_kernel(a_ref, b_ref, o_ref, stats_ref, acc_ref):
    # bf16 x bf16 -> f32 accumulate; epilogue writes bf16 tile + f32 BN partial
    # statistics (row 0 = sum, row 1 = sum of squares) per (i, j) output tile.
    @pl.when(pl.program_id(2) == 0)
    def _():
        acc_ref[...] = jnp.zeros_like(acc_ref)

    acc_ref[...] += jnp.dot(a_ref[...], b_ref[...],
                            preferred_element_type=jnp.float32)

    @pl.when(pl.program_id(2) == pl.num_programs(2) - 1)
    def _():
        res = acc_ref[...]
        o_ref[...] = res.astype(o_ref.dtype)
        s = jnp.sum(res, axis=0, keepdims=True)            # (1, TN) f32
        sq = jnp.sum(res * res, axis=0, keepdims=True)     # (1, TN) f32
        row = jax.lax.broadcasted_iota(jnp.int32, stats_ref.shape, 0)
        stats_ref[...] = (jnp.where(row == 0, s, 0.0)
                          + jnp.where(row == 1, sq, 0.0))


def matmul_pallas(a, b, out_dtype=jnp.float32):
    # a: (Mpad, Kpad) bf16, b: (Kpad, Npad) bf16.
    M, K = a.shape
    _, N = b.shape
    tk = _pick_tile(K, TK_CANDIDATES)
    tn = _pick_tile(N, TN_CANDIDATES)
    grid = (M // TM, N // tn, K // tk)
    return pl.pallas_call(
        _matmul_kernel,
        out_shape=jax.ShapeDtypeStruct((M, N), out_dtype),
        grid_spec=pltpu.PrefetchScalarGridSpec(
            num_scalar_prefetch=0,
            grid=grid,
            in_specs=[pl.BlockSpec((TM, tk), lambda i, j, k: (i, k)),
                      pl.BlockSpec((tk, tn), lambda i, j, k: (k, j))],
            out_specs=pl.BlockSpec((TM, tn), lambda i, j, k: (i, j)),
            scratch_shapes=[pltpu.VMEM((TM, tn), jnp.float32)]),
        compiler_params=pltpu.CompilerParams(
            dimension_semantics=("parallel", "parallel", "arbitrary")),
    )(a, b)


def matmul_bn_pallas(a, b):
    # a: (Mpad, Kpad) bf16, b: (Kpad, Npad) bf16.
    # Returns y (Mpad, Npad) bf16 and stats ((Mpad//TM)*8, Npad) f32.
    M, K = a.shape
    _, N = b.shape
    tk = _pick_tile(K, TK_CANDIDATES)
    tn = _pick_tile(N, TN_CANDIDATES)
    gi = M // TM
    grid = (gi, N // tn, K // tk)
    return pl.pallas_call(
        _matmul_bn_kernel,
        out_shape=(jax.ShapeDtypeStruct((M, N), jnp.bfloat16),
                   jax.ShapeDtypeStruct((gi * 8, N), jnp.float32)),
        grid_spec=pltpu.PrefetchScalarGridSpec(
            num_scalar_prefetch=0,
            grid=grid,
            in_specs=[pl.BlockSpec((TM, tk), lambda i, j, k: (i, k)),
                      pl.BlockSpec((tk, tn), lambda i, j, k: (k, j))],
            out_specs=[pl.BlockSpec((TM, tn), lambda i, j, k: (i, j)),
                       pl.BlockSpec((8, tn), lambda i, j, k: (i, j))],
            scratch_shapes=[pltpu.VMEM((TM, tn), jnp.float32)]),
        compiler_params=pltpu.CompilerParams(
            dimension_semantics=("parallel", "parallel", "arbitrary")),
    )(a, b)


def _scale_bias_kernel(x_ref, s_ref, b_ref, o_ref, *, relu):
    y = x_ref[...].astype(jnp.float32) * s_ref[...] + b_ref[...]
    if relu:
        y = jnp.maximum(y, 0.0)
    o_ref[...] = y.astype(o_ref.dtype)


def _scale_bias_res_kernel(x_ref, s_ref, b_ref, r_ref, o_ref, *, relu):
    y = (x_ref[...].astype(jnp.float32) * s_ref[...] + b_ref[...]
         + r_ref[...].astype(jnp.float32))
    if relu:
        y = jnp.maximum(y, 0.0)
    o_ref[...] = y.astype(o_ref.dtype)


def scale_bias_pallas(x, scale, bias, residual=None, *, relu):
    # x: (Mpad, Cpad) bf16; scale/bias: (1, Cpad) f32; residual bf16 or None.
    M, C = x.shape
    tm = _pick_tile(M, (512, 256, 128))
    x_spec = pl.BlockSpec((tm, C), lambda i: (i, 0))
    v_spec = pl.BlockSpec((1, C), lambda i: (0, 0))
    if residual is None:
        kern = partial(_scale_bias_kernel, relu=relu)
        in_specs = [x_spec, v_spec, v_spec]
        args = (x, scale, bias)
    else:
        kern = partial(_scale_bias_res_kernel, relu=relu)
        in_specs = [x_spec, v_spec, v_spec, x_spec]
        args = (x, scale, bias, residual)
    return pl.pallas_call(
        kern,
        out_shape=jax.ShapeDtypeStruct((M, C), jnp.bfloat16),
        grid_spec=pltpu.PrefetchScalarGridSpec(
            num_scalar_prefetch=0,
            grid=(M // tm,),
            in_specs=in_specs,
            out_specs=x_spec),
        compiler_params=pltpu.CompilerParams(
            dimension_semantics=("parallel",)),
    )(*args)


def _max_reduce_kernel(p_ref, o_ref):
    # (tm, 9, C) -> max over window axis 1.
    o_ref[...] = jnp.max(p_ref[...], axis=1)


def max_reduce_pallas(p):
    # p: (Mpad, 9, Cpad) bf16 -> (Mpad, Cpad) bf16 max over window positions.
    M, KK, C = p.shape
    tm = _pick_tile(M, (512, 256, 128))
    return pl.pallas_call(
        _max_reduce_kernel,
        out_shape=jax.ShapeDtypeStruct((M, C), p.dtype),
        grid_spec=pltpu.PrefetchScalarGridSpec(
            num_scalar_prefetch=0,
            grid=(M // tm,),
            in_specs=[pl.BlockSpec((tm, KK, C), lambda i: (i, 0, 0))],
            out_specs=pl.BlockSpec((tm, C), lambda i: (i, 0))),
        compiler_params=pltpu.CompilerParams(
            dimension_semantics=("parallel",)),
    )(p)


def _avg_reduce_kernel(x_ref, o_ref):
    o_ref[...] = jnp.mean(x_ref[...].astype(jnp.float32), axis=1)


def avg_reduce_pallas(x):
    # x: (N, HW, Cpad) bf16 -> (N, Cpad) f32 mean over HW (global avg pool).
    N, HW, C = x.shape
    return pl.pallas_call(
        _avg_reduce_kernel,
        out_shape=jax.ShapeDtypeStruct((N, C), jnp.float32),
        grid_spec=pltpu.PrefetchScalarGridSpec(
            num_scalar_prefetch=0,
            grid=(1,),
            in_specs=[pl.BlockSpec((N, HW, C), lambda i: (0, 0, 0))],
            out_specs=pl.BlockSpec((N, C), lambda i: (0, 0))),
    )(x)


# ------------------------------ JAX glue ------------------------------------

def extract_patches(x, kh, kw, stride, pad, fill=0.0):
    # x: (N, H, W, C) -> (N, Ho, Wo, kh*kw, C) patches, ordering (kh, kw, c).
    N, H, W, C = x.shape
    if pad > 0:
        x = jnp.pad(x, ((0, 0), (pad, pad), (pad, pad), (0, 0)),
                    constant_values=fill)
    Ho = (H + 2 * pad - kh) // stride + 1
    Wo = (W + 2 * pad - kw) // stride + 1
    cols = []
    for di in range(kh):
        for dj in range(kw):
            sl = x[:, di:di + stride * (Ho - 1) + 1:stride,
                   dj:dj + stride * (Wo - 1) + 1:stride, :]
            cols.append(sl)
    return jnp.stack(cols, axis=3)


@partial(jax.jit, static_argnames=("kh", "kw", "stride", "pad", "relu"))
def conv_bn(x, w2d, gamma, beta, residual=None, *, kh, kw, stride, pad, relu):
    """conv (no bias) -> BatchNorm (batch statistics) -> [+residual] -> [ReLU]."""
    N, H, W, Cin = x.shape
    Cout = gamma.shape[0]
    Kpad, Cpad = w2d.shape

    if kh == 1 and kw == 1 and pad == 0:
        xs = x[:, ::stride, ::stride, :]               # no im2col for 1x1 convs
        Ho, Wo = xs.shape[1], xs.shape[2]
        KK = 1
        A = xs.reshape(N * Ho * Wo, Cin)
    else:
        patches = extract_patches(x, kh, kw, stride, pad, fill=0.0)
        _, Ho, Wo, KK, _ = patches.shape
        A = patches.reshape(N * Ho * Wo, KK * Cin)

    M = N * Ho * Wo
    Mpad = _padded_rows(M)
    A = A.astype(jnp.bfloat16)
    A = jnp.pad(A, ((0, Mpad - M), (0, Kpad - KK * Cin)))

    # MXU matmul with fused BN partial statistics (f32).
    y, stats = matmul_bn_pallas(A, w2d)                # y bf16 (Mpad, Cpad)
    stats = stats.reshape(Mpad // TM, 8, Cpad).sum(axis=0)
    mean = stats[0] / M                                # padded rows are zero
    var = jnp.maximum(stats[1] / M - mean * mean, 0.0)
    gamma_p = jnp.pad(gamma, (0, Cpad - Cout))
    beta_p = jnp.pad(beta, (0, Cpad - Cout))
    scale = gamma_p * jax.lax.rsqrt(var + EPS)
    bias = beta_p - mean * scale

    if residual is not None:
        r = residual.reshape(M, Cout).astype(jnp.bfloat16)
        r = jnp.pad(r, ((0, Mpad - M), (0, Cpad - Cout)))
    else:
        r = None

    z = scale_bias_pallas(y, scale[None, :], bias[None, :], r, relu=relu)
    return z[:M, :Cout].reshape(N, Ho, Wo, Cout)


@jax.jit
def maxpool_3x3_s2(x):
    N, H, W, C = x.shape
    patches = extract_patches(x, 3, 3, 2, 1, fill=-1e30)   # (N,Ho,Wo,9,C)
    Ho, Wo = patches.shape[1], patches.shape[2]
    M = N * Ho * Wo
    p = patches.reshape(M, 9, C)                           # keep (M, 9, C); no transpose
    Mpad, Cpad = _padded_rows(M), _rup(C, 128)
    p = jnp.pad(p, ((0, Mpad - M), (0, 0), (0, Cpad - C)),
                constant_values=-1e30)
    out = max_reduce_pallas(p)
    return out[:M, :C].reshape(N, Ho, Wo, C)


@jax.jit
def global_avgpool(x):
    # AvgPool2d(7) on a 7x7 map == global mean over spatial positions.
    N, H, W, C = x.shape
    Cpad = _rup(C, 128)
    xr = jnp.pad(x.reshape(N, H * W, C), ((0, 0), (0, 0), (0, Cpad - C)))
    return avg_reduce_pallas(xr)[:, :C]


@partial(jax.jit, static_argnames=("out_dim",))
def linear(x, w_aug, *, out_dim):
    # w_aug: (Kpad, Npad) bf16 weight with bias folded in via a ones column.
    N, Cin = x.shape
    Kpad, Npad = w_aug.shape
    Mpad = _rup(N, TM)
    a = jnp.concatenate([x, jnp.ones((N, 1), jnp.float32)], axis=1)
    a = jnp.pad(a, ((0, Mpad - N), (0, Kpad - (Cin + 1)))).astype(jnp.bfloat16)
    y = matmul_pallas(a, w_aug, out_dtype=jnp.float32)
    return y[:N, :out_dim]


# --------------------------- parameter setup --------------------------------

def make_conv_w(key, cout, cin, kh, kw):
    n = kh * kw * cout
    return jax.random.normal(key, (cout, cin, kh, kw), jnp.float32) * math.sqrt(2.0 / n)


def pack_conv_w(w):
    # (cout, cin, kh, kw) -> padded bf16 im2col weight (Kpad, Cpad).
    cout, cin, kh, kw = w.shape
    K = kh * kw * cin
    w2 = jnp.transpose(w, (2, 3, 1, 0)).reshape(K, cout)
    Kpad, Cpad = _rup(K, 128), _rup(cout, 128)
    return jnp.pad(w2, ((0, Kpad - K), (0, Cpad - cout))).astype(jnp.bfloat16)


def make_bottleneck_params(key, inplanes, planes, stride, has_ds):
    ks = jax.random.split(key, 4)
    exp = 4
    p = {
        "w1": pack_conv_w(make_conv_w(ks[0], planes, inplanes, 1, 1)),
        "g1": jnp.ones((planes,), jnp.float32),
        "b1": jnp.zeros((planes,), jnp.float32),
        "w2": pack_conv_w(make_conv_w(ks[1], planes, planes, 3, 3)),
        "g2": jnp.ones((planes,), jnp.float32),
        "b2": jnp.zeros((planes,), jnp.float32),
        "w3": pack_conv_w(make_conv_w(ks[2], planes * exp, planes, 1, 1)),
        "g3": jnp.ones((planes * exp,), jnp.float32),
        "b3": jnp.zeros((planes * exp,), jnp.float32),
        "stride": stride,
    }
    if has_ds:
        p["wd"] = pack_conv_w(make_conv_w(ks[3], planes * exp, inplanes, 1, 1))
        p["gd"] = jnp.ones((planes * exp,), jnp.float32)
        p["bd"] = jnp.zeros((planes * exp,), jnp.float32)
    return p


def make_resnet_params(key, layers=(3, 8, 36, 3), num_classes=68):
    params = {}
    params["conv1"] = pack_conv_w(make_conv_w(jax.random.fold_in(key, 0), 64, 3 + 68, 7, 7))
    params["g1"] = jnp.ones((64,), jnp.float32)
    params["b1"] = jnp.zeros((64,), jnp.float32)

    inplanes = 64
    layer_params = []
    for li, (planes, nblocks, stride) in enumerate(zip((64, 128, 256, 512), layers, (1, 2, 2, 2))):
        blocks = []
        for bi in range(nblocks):
            s = stride if bi == 0 else 1
            has_ds = (bi == 0) and (s != 1 or inplanes != planes * 4)
            bkey = jax.random.fold_in(key, 1000 * (li + 1) + bi)
            blocks.append(make_bottleneck_params(bkey, inplanes, planes, s, has_ds))
            inplanes = planes * 4
        layer_params.append(blocks)
    params["layers"] = layer_params

    fan_in = 512 * 4
    bound = 1.0 / math.sqrt(fan_in)
    fk1, fk2 = jax.random.split(jax.random.fold_in(key, 99999))
    w = jax.random.uniform(fk1, (fan_in, num_classes), jnp.float32, -bound, bound)
    b = jax.random.uniform(fk2, (num_classes,), jnp.float32, -bound, bound)
    w_aug = jnp.concatenate([w, b[None, :]], axis=0)            # (fan_in+1, nc)
    Kpad, Npad = _rup(fan_in + 1, 128), _rup(num_classes, 128)
    params["fc"] = jnp.pad(
        w_aug, ((0, Kpad - fan_in - 1), (0, Npad - num_classes))).astype(jnp.bfloat16)
    params["num_classes"] = num_classes
    return params


# ------------------------------ forward pass --------------------------------

def bottleneck_forward(x, p):
    stride = p["stride"]
    out = conv_bn(x, p["w1"], p["g1"], p["b1"], kh=1, kw=1, stride=1, pad=0, relu=True)
    out = conv_bn(out, p["w2"], p["g2"], p["b2"], kh=3, kw=3, stride=stride, pad=1, relu=True)
    if "wd" in p:
        residual = conv_bn(x, p["wd"], p["gd"], p["bd"], kh=1, kw=1,
                           stride=stride, pad=0, relu=False)
    else:
        residual = x
    out = conv_bn(out, p["w3"], p["g3"], p["b3"], residual,
                  kh=1, kw=1, stride=1, pad=0, relu=True)
    return out


def resnet_depth_forward(params, x_nchw):
    # Accepts PyTorch-convention NCHW input; kernels run in NHWC bf16.
    x = jnp.transpose(x_nchw, (0, 2, 3, 1)).astype(jnp.bfloat16)
    x = conv_bn(x, params["conv1"], params["g1"], params["b1"],
                kh=7, kw=7, stride=2, pad=3, relu=True)
    x = maxpool_3x3_s2(x)
    for blocks in params["layers"]:
        for p in blocks:
            x = bottleneck_forward(x, p)
    feat = global_avgpool(x)                                   # (N, 2048) f32
    return linear(feat, params["fc"], out_dim=params["num_classes"])


# ------------------------------- self-check ---------------------------------

def _selfcheck():
    key = jax.random.PRNGKey(42)
    x = jax.random.normal(key, (1, 16, 16, 8), jnp.float32)
    w = jax.random.normal(jax.random.fold_in(key, 1), (16, 8, 3, 3), jnp.float32) * 0.1
    g = jax.random.uniform(jax.random.fold_in(key, 2), (16,), jnp.float32, 0.5, 1.5)
    b = jax.random.uniform(jax.random.fold_in(key, 3), (16,), jnp.float32, -0.5, 0.5)
    out = conv_bn(x, pack_conv_w(w), g, b, kh=3, kw=3, stride=2, pad=1, relu=True)

    ref = jax.lax.conv_general_dilated(
        jnp.transpose(x, (0, 3, 1, 2)), w, (2, 2), ((1, 1), (1, 1)),
        dimension_numbers=("NCHW", "OIHW", "NCHW"),
        precision=jax.lax.Precision.HIGHEST)
    ref = jnp.transpose(ref, (0, 2, 3, 1))
    m = jnp.mean(ref, axis=(0, 1, 2))
    v = jnp.var(ref, axis=(0, 1, 2))
    ref = jnp.maximum((ref - m) / jnp.sqrt(v + EPS) * g + b, 0.0)
    # bf16 matmul operands -> loose tolerance; catches layout/ordering bugs.
    err = float(jnp.max(jnp.abs(out.astype(jnp.float32) - ref)))
    assert err < 0.25, f"conv_bn self-check failed, max abs err = {err}"


if __name__ == "__main__":
    _selfcheck()

    key = jax.random.PRNGKey(0)
    params = make_resnet_params(key)
    # Input consistent with the module: 3+68=71 channels, 224x224 so the final
    # 7x7 AvgPool2d(7) is valid; batch kept small (1).
    x = jax.random.normal(jax.random.fold_in(key, 123), (1, 71, 224, 224), jnp.float32)

    out = resnet_depth_forward(params, x)
    out = jax.block_until_ready(out)

    assert out.shape == (1, 68), out.shape
    assert bool(jnp.all(jnp.isfinite(out)))
    print("KERNEL_OK")
</pallas_src>

<mosaic_0001>
module attributes {stable_mosaic.version = 11 : i64} {
  func.func @_matmul_bn_kernel(%arg0: i32, %arg1: i32, %arg2: i32, %arg3: memref<128x128xbf16, #tpu.memory_space<vmem>>, %arg4: memref<128x128xbf16, #tpu.memory_space<vmem>>, %arg5: memref<128x128xbf16, #tpu.memory_space<vmem>>, %arg6: memref<8x128xf32, #tpu.memory_space<vmem>>, %arg7: memref<128x128xf32, #tpu.memory_space<vmem>>) attributes {dimension_semantics = [#tpu.dimension_semantics<parallel>, #tpu.dimension_semantics<parallel>, #tpu.dimension_semantics<arbitrary>], iteration_bounds = array<i64: 1, 1, 1>, scalar_prefetch = 0 : i64, scratch_operands = 1 : i64, tpu.core_type = #tpu.core_type<tc>, window_params = [{transform_indices = @transform_0, window_bounds = array<i64: 128, 128>}, {transform_indices = @transform_1, window_bounds = array<i64: 128, 128>}, {transform_indices = @transform_2, window_bounds = array<i64: 128, 128>}, {transform_indices = @transform_3, window_bounds = array<i64: 8, 128>}]} {
    %c0_i32 = arith.constant 0 : i32
    %0 = arith.cmpi eq, %arg2, %c0_i32 : i32
    %1 = arith.extui %0 : i1 to i32
    %c0_i32_0 = arith.constant 0 : i32
    %2 = arith.cmpi ne, %1, %c0_i32_0 : i32
    scf.if %2 {
      %cst_10 = arith.constant 0.000000e+00 : f32
      %12 = vector.broadcast %cst_10 : f32 to vector<128x128xf32>
      %c0_11 = arith.constant 0 : index
      %c0_12 = arith.constant 0 : index
      %13 = vector.load %arg7[%c0_11, %c0_12] : memref<128x128xf32, #tpu.memory_space<vmem>>, vector<128x128xf32>
      tpu.vector_store %arg7[%c0_11, %c0_12], %12 {strides = array<i32>} : memref<128x128xf32, #tpu.memory_space<vmem>>, vector<128x128xf32>,
    } else {
    }
    %c0 = arith.constant 0 : index
    %c0_1 = arith.constant 0 : index
    %3 = vector.load %arg7[%c0, %c0_1] : memref<128x128xf32, #tpu.memory_space<vmem>>, vector<128x128xf32>
    %c0_2 = arith.constant 0 : index
    %c0_3 = arith.constant 0 : index
    %4 = vector.load %arg3[%c0_2, %c0_3] : memref<128x128xbf16, #tpu.memory_space<vmem>>, vector<128x128xbf16>
    %c0_4 = arith.constant 0 : index
    %c0_5 = arith.constant 0 : index
    %5 = vector.load %arg4[%c0_4, %c0_5] : memref<128x128xbf16, #tpu.memory_space<vmem>>, vector<128x128xbf16>
    %cst = arith.constant dense<0.000000e+00> : vector<128x128xf32>
    %6 = tpu.matmul %4, %5, %cst {dimension_numbers = #tpu.dot_dimension_numbers<[1], [0], [0], [1], [0, 0, 1, 1], [], []>} : vector<128x128xbf16>, vector<128x128xbf16>, vector<128x128xf32> -> vector<128x128xf32>
    %7 = arith.addf %3, %6 : vector<128x128xf32>
    %c0_6 = arith.constant 0 : index
    %c0_7 = arith.constant 0 : index
    %8 = vector.load %arg7[%c0_6, %c0_7] : memref<128x128xf32, #tpu.memory_space<vmem>>, vector<128x128xf32>
    tpu.vector_store %arg7[%c0_6, %c0_7], %7 {strides = array<i32>} : memref<128x128xf32, #tpu.memory_space<vmem>>, vector<128x128xf32>,
    %c0_i32_8 = arith.constant 0 : i32
    %9 = arith.cmpi eq, %arg2, %c0_i32_8 : i32
    %10 = arith.extui %9 : i1 to i32
    %c0_i32_9 = arith.constant 0 : i32
    %11 = arith.cmpi ne, %10, %c0_i32_9 : i32
    scf.if %11 {
      %c0_10 = arith.constant 0 : index
      %c0_11 = arith.constant 0 : index
      %12 = vector.load %arg7[%c0_10, %c0_11] : memref<128x128xf32, #tpu.memory_space<vmem>>, vector<128x128xf32>
      %13 = arith.truncf %12 : vector<128x128xf32> to vector<128x128xbf16>
      %c0_12 = arith.constant 0 : index
      %c0_13 = arith.constant 0 : index
      %14 = vector.load %arg5[%c0_12, %c0_13] : memref<128x128xbf16, #tpu.memory_space<vmem>>, vector<128x128xbf16>
      tpu.vector_store %arg5[%c0_12, %c0_13], %13 {strides = array<i32>} : memref<128x128xbf16, #tpu.memory_space<vmem>>, vector<128x128xbf16>,
      %cst_14 = arith.constant dense<0.000000e+00> : vector<128xf32>
      %15 = vector.multi_reduction <add>, %12, %cst_14 [0] : vector<128x128xf32> to vector<128xf32>
      %16 = vector.shape_cast %15 : vector<128xf32> to vector<1x128xf32>
      %17 = arith.mulf %12, %12 : vector<128x128xf32>
      %cst_15 = arith.constant dense<0.000000e+00> : vector<128xf32>
      %18 = vector.multi_reduction <add>, %17, %cst_15 [0] : vector<128x128xf32> to vector<128xf32>
      %19 = vector.shape_cast %18 : vector<128xf32> to vector<1x128xf32>
      %20 = tpu.iota {dimensions = array<i32: 0>} : vector<8x128xi32>
      %c0_i32_16 = arith.constant 0 : i32
      %21 = vector.broadcast %c0_i32_16 : i32 to vector<8x128xi32>
      %22 = arith.cmpi eq, %20, %21 : vector<8x128xi32>
      %cst_17 = arith.constant 0.000000e+00 : f32
      %23 = vector.shape_cast %16 : vector<1x128xf32> to vector<1x128xf32>
      %24 = vector.broadcast %23 : vector<1x128xf32> to vector<8x128xf32>
      %25 = vector.broadcast %cst_17 : f32 to vector<8x128xf32>
      %26 = arith.select %22, %24, %25 : vector<8x128xi1>, vector<8x128xf32>
      %c1_i32 = arith.constant 1 : i32
      %27 = vector.broadcast %c1_i32 : i32 to vector<8x128xi32>
      %28 = arith.cmpi eq, %20, %27 : vector<8x128xi32>
      %cst_18 = arith.constant 0.000000e+00 : f32
      %29 = vector.shape_cast %19 : vector<1x128xf32> to vector<1x128xf32>
      %30 = vector.broadcast %29 : vector<1x128xf32> to vector<8x128xf32>
      %31 = vector.broadcast %cst_18 : f32 to vector<8x128xf32>
      %32 = arith.select %28, %30, %31 : vector<8x128xi1>, vector<8x128xf32>
      %33 = arith.addf %26, %32 : vector<8x128xf32>
      %c0_19 = arith.constant 0 : index
      %c0_20 = arith.constant 0 : index
      %34 = vector.load %arg6[%c0_19, %c0_20] : memref<8x128xf32, #tpu.memory_space<vmem>>, vector<8x128xf32>
      tpu.vector_store %arg6[%c0_19, %c0_20], %33 {strides = array<i32>} : memref<8x128xf32, #tpu.memory_space<vmem>>, vector<8x128xf32>,
    } else {
    }
    return
  }
  func.func @transform_0(%arg0: i32, %arg1: i32, %arg2: i32) -> (i32, i32) {
    %c0_i32 = arith.constant 0 : i32
    return %arg0, %arg2 : i32, i32
  }
  func.func @transform_1(%arg0: i32, %arg1: i32, %arg2: i32) -> (i32, i32) {
    %c0_i32 = arith.constant 0 : i32
    return %arg2, %arg1 : i32, i32
  }
  func.func @transform_2(%arg0: i32, %arg1: i32, %arg2: i32) -> (i32, i32) {
    %c0_i32 = arith.constant 0 : i32
    return %arg0, %arg1 : i32, i32
  }
  func.func @transform_3(%arg0: i32, %arg1: i32, %arg2: i32) -> (i32, i32) {
    %c0_i32 = arith.constant 0 : i32
    return %arg0, %arg1 : i32, i32
  }
}

module attributes {stable_mosaic.version = 11 : i64} {
  func.func @_scale_bias_kernel(%arg0: i32, %arg1: memref<128x128xbf16, #tpu.memory_space<vmem>>, %arg2: memref<1x128xf32, #tpu.memory_space<vmem>>, %arg3: memref<1x128xf32, #tpu.memory_space<vmem>>, %arg4: memref<128x128xbf16, #tpu.memory_space<vmem>>) attributes {dimension_semantics = [#tpu.dimension_semantics<parallel>], iteration_bounds = array<i64: 1>, scalar_prefetch = 0 : i64, scratch_operands = 0 : i64, tpu.core_type = #tpu.core_type<tc>, window_params = [{transform_indices = @transform_0, window_bounds = array<i64: 128, 128>}, {pipeline_mode = #tpu.pipeline_mode<synchronous>, transform_indices = @transform_1, window_bounds = array<i64: 1, 128>}, {pipeline_mode = #tpu.pipeline_mode<synchronous>, transform_indices = @transform_2, window_bounds = array<i64: 1, 128>}, {transform_indices = @transform_3, window_bounds = array<i64: 128, 128>}]} {
    %c0 = arith.constant 0 : index
    %c0_0 = arith.constant 0 : index
    %0 = vector.load %arg1[%c0, %c0_0] : memref<128x128xbf16, #tpu.memory_space<vmem>>, vector<128x128xbf16>
    %1 = arith.extf %0 : vector<128x128xbf16> to vector<128x128xf32>
    %c0_1 = arith.constant 0 : index
    %c0_2 = arith.constant 0 : index
    %2 = vector.load %arg2[%c0_1, %c0_2] : memref<1x128xf32, #tpu.memory_space<vmem>>, vector<1x128xf32>
    %3 = vector.broadcast %2 : vector<1x128xf32> to vector<128x128xf32>
    %4 = arith.mulf %1, %3 : vector<128x128xf32>
    %c0_3 = arith.constant 0 : index
    %c0_4 = arith.constant 0 : index
    %5 = vector.load %arg3[%c0_3, %c0_4] : memref<1x128xf32, #tpu.memory_space<vmem>>, vector<1x128xf32>
    %6 = vector.broadcast %5 : vector<1x128xf32> to vector<128x128xf32>
    %7 = arith.addf %4, %6 : vector<128x128xf32>
    %cst = arith.constant 0.000000e+00 : f32
    %8 = vector.broadcast %cst : f32 to vector<128x128xf32>
    %9 = arith.maximumf %7, %8 : vector<128x128xf32>
    %10 = arith.truncf %9 : vector<128x128xf32> to vector<128x128xbf16>
    %c0_5 = arith.constant 0 : index
    %c0_6 = arith.constant 0 : index
    %11 = vector.load %arg4[%c0_5, %c0_6] : memref<128x128xbf16, #tpu.memory_space<vmem>>, vector<128x128xbf16>
    tpu.vector_store %arg4[%c0_5, %c0_6], %10 {strides = array<i32>} : memref<128x128xbf16, #tpu.memory_space<vmem>>, vector<128x128xbf16>,
    return
  }
  func.func @transform_0(%arg0: i32) -> (i32, i32) {
    %c0_i32 = arith.constant 0 : i32
    %c0_i32_0 = arith.constant 0 : i32
    return %arg0, %c0_i32 : i32, i32
  }
  func.func @transform_1(%arg0: i32) -> (i32, i32) {
    %c0_i32 = arith.constant 0 : i32
    %c0_i32_0 = arith.constant 0 : i32
    %c0_i32_1 = arith.constant 0 : i32
    return %c0_i32, %c0_i32_0 : i32, i32
  }
  func.func @transform_2(%arg0: i32) -> (i32, i32) {
    %c0_i32 = arith.constant 0 : i32
    %c0_i32_0 = arith.constant 0 : i32
    %c0_i32_1 = arith.constant 0 : i32
    return %c0_i32, %c0_i32_0 : i32, i32
  }
  func.func @transform_3(%arg0: i32) -> (i32, i32) {
    %c0_i32 = arith.constant 0 : i32
    %c0_i32_0 = arith.constant 0 : i32
    return %arg0, %c0_i32 : i32, i32
  }
}

</mosaic_0001>

<llo_original>
// kernel: conv_bn.3
$region0: #{conv_bn.3}
  #allocation0 [shape = 'u32[]', space=smem, size = 0x4, offset = 0x4, fixed_abs, tag = 'smem constant byte address 0x4 - core index']
  #allocation1 [shape = 'u32[144,128]{1,0:T(1,128)}', space=vmem, size = 0x12000, scoped, tag = 'internal scratch']
  %s0 = inlined_call_operand.vmem [shape: bf16[128,128], index: 0, kind: input, shape index: {}]
  %s1 = inlined_call_operand.vmem [shape: f32[1,128], index: 1, kind: input, shape index: {}]
  %s2 = inlined_call_operand.vmem [shape: f32[1,128], index: 2, kind: input, shape index: {}]
  %s3 = inlined_call_operand.vmem [shape: bf16[128,128], index: 3, kind: output, shape index: {}]
  %s4 = sld [smem:[#allocation0]]
  $region22: #{conv_bn.3} parent=0
    _
  %s6 = ssub.s32 1, %s4
  %s7 = scalar_select 0, %s6, %s4
  // Predicated region
  $region2: #{conv_bn.3} parent=0 // pred_check
    _
  $region3: #{conv_bn.3} parent=0 // pred_check_branch
    %9 = sbr.rel (0) target = $region5
  $region4: #{conv_bn.3} parent=0 // pred_region
    _
  $region5: #{conv_bn.3} parent=0 // pred_fallthru
    _
  // Predicated region
  $region6: #{conv_bn.3} parent=0 // pred_check
    _
  $region7: #{conv_bn.3} parent=0 // pred_check_branch
    %11 = sbr.rel (0) target = $region9
  $region8: #{conv_bn.3} parent=0 // pred_region
    _
  $region9: #{conv_bn.3} parent=0 // pred_fallthru
    _
  // Predicated region
  $region10: #{conv_bn.3} parent=0 // pred_check
    _
  $region11: #{conv_bn.3} parent=0 // pred_check_branch
    %13 = sbr.rel (0) target = $region13
  $region12: #{conv_bn.3} parent=0 // pred_region
    _
  $region13: #{conv_bn.3} parent=0 // pred_fallthru
    _
  %v14 = vld [vmem:[%s0] sm:$0xf]
  %v15 = vld [vmem:[%s0 + $0x4] sm:$0xf]
  %v16 = vld [vmem:[%s0 + $0x8] sm:$0xf]
  %v17 = vld [vmem:[%s0 + $0xc] sm:$0xf]
  %v18 = vld [vmem:[%s0 + $0x10] sm:$0xf]
  %v19 = vld [vmem:[%s0 + $0x14] sm:$0xf]
  %v20 = vld [vmem:[%s0 + $0x18] sm:$0xf]
  %v21 = vld [vmem:[%s0 + $0x1c] sm:$0xf]
  %v22 = vld [vmem:[%s0 + $0x20] sm:$0xf]
  %v23 = vld [vmem:[%s0 + $0x24] sm:$0xf]
  %v24 = vld [vmem:[%s0 + $0x28] sm:$0xf]
  %v25 = vld [vmem:[%s0 + $0x2c] sm:$0xf]
  %v26 = vld [vmem:[%s0 + $0x30] sm:$0xf]
  %v27 = vld [vmem:[%s0 + $0x34] sm:$0xf]
  %v28 = vld [vmem:[%s0 + $0x38] sm:$0xf]
  %v29 = vld [vmem:[%s0 + $0x3c] sm:$0xf]
  %v30 = vunpack.c.l.bf16 %v14
  %v31 = vunpack.c.l.bf16 %v15
  %v32 = vunpack.c.l.bf16 %v16
  %v33 = vunpack.c.l.bf16 %v17
  %v34 = vunpack.c.l.bf16 %v18
  %v35 = vunpack.c.l.bf16 %v19
  %v36 = vunpack.c.l.bf16 %v20
  %v37 = vunpack.c.l.bf16 %v21
  %v38 = vunpack.c.l.bf16 %v22
  %v39 = vunpack.c.l.bf16 %v23
  %v40 = vunpack.c.l.bf16 %v24
  %v41 = vunpack.c.l.bf16 %v25
  %v42 = vunpack.c.l.bf16 %v26
  %v43 = vunpack.c.l.bf16 %v27
  %v44 = vunpack.c.l.bf16 %v28
  %v45 = vunpack.c.l.bf16 %v29
  %v46 = vld [vmem:[%s1] sm:$0x1]
  %v48 = vlaneseq
  %v49 = vshrl.u32 %v48, 7
  %v50 = vsub.s32 0, %v49
  %v51 = vrot.slane %v46, %v50
  %v53 = vmul.f32 %v30, %v51
  %v54 = vmul.f32 %v31, %v51
  %v55 = vmul.f32 %v32, %v51
  %v56 = vmul.f32 %v33, %v51
  %v57 = vmul.f32 %v34, %v51
  %v58 = vmul.f32 %v35, %v51
  %v59 = vmul.f32 %v36, %v51
  %v60 = vmul.f32 %v37, %v51
  %v61 = vmul.f32 %v38, %v51
  %v62 = vmul.f32 %v39, %v51
  %v63 = vmul.f32 %v40, %v51
  %v64 = vmul.f32 %v41, %v51
  %v65 = vmul.f32 %v42, %v51
  %v66 = vmul.f32 %v43, %v51
  %v67 = vmul.f32 %v44, %v51
  %v68 = vmul.f32 %v45, %v51
  %v69 = vld [vmem:[%s2] sm:$0x1]
  %v71 = vlaneseq
  %v72 = vshrl.u32 %v71, 7
  %v73 = vsub.s32 0, %v72
  %v74 = vrot.slane %v69, %v73
  %v76 = vadd.f32 %v53, %v74
  %v77 = vadd.f32 %v54, %v74
  %v78 = vadd.f32 %v55, %v74
  %v79 = vadd.f32 %v56, %v74
  %v80 = vadd.f32 %v57, %v74
  %v81 = vadd.f32 %v58, %v74
  %v82 = vadd.f32 %v59, %v74
  %v83 = vadd.f32 %v60, %v74
  %v84 = vadd.f32 %v61, %v74
  %v85 = vadd.f32 %v62, %v74
  %v86 = vadd.f32 %v63, %v74
  %v87 = vadd.f32 %v64, %v74
  %v88 = vadd.f32 %v65, %v74
  %v89 = vadd.f32 %v66, %v74
  %v90 = vadd.f32 %v67, %v74
  %v91 = vadd.f32 %v68, %v74
  %v92 = vmax.f32 %v76, 0.0
  %v93 = vmax.f32 %v77, 0.0
  %v94 = vmax.f32 %v78, 0.0
  %v95 = vmax.f32 %v79, 0.0
  %v96 = vmax.f32 %v80, 0.0
  %v97 = vmax.f32 %v81, 0.0
  %v98 = vmax.f32 %v82, 0.0
  %v99 = vmax.f32 %v83, 0.0
  %v100 = vmax.f32 %v84, 0.0
  %v101 = vmax.f32 %v85, 0.0
  %v102 = vmax.f32 %v86, 0.0
  %v103 = vmax.f32 %v87, 0.0
  %v104 = vmax.f32 %v88, 0.0
  %v105 = vmax.f32 %v89, 0.0
  %v106 = vmax.f32 %v90, 0.0
  %v107 = vmax.f32 %v91, 0.0
  %v108 = vpack.c.bf16 %v93, %v92
  %v109 = vpack.c.bf16 %v95, %v94
  %v110 = vpack.c.bf16 %v97, %v96
  %v111 = vpack.c.bf16 %v99, %v98
  %v112 = vpack.c.bf16 %v101, %v100
  %v113 = vpack.c.bf16 %v103, %v102
  %v114 = vpack.c.bf16 %v105, %v104
  %v115 = vpack.c.bf16 %v107, %v106
  %v124 = vunpack.c.l.b16 %v108
  %v125 = vunpack.c.h.b16 %v108
  %v126 = vunpack.c.l.b16 %v109
  %v127 = vunpack.c.h.b16 %v109
  %v128 = vunpack.c.l.b16 %v110
  %v129 = vunpack.c.h.b16 %v110
  %v130 = vunpack.c.l.b16 %v111
  %v131 = vunpack.c.h.b16 %v111
  %v132 = vunpack.c.l.b16 %v112
  %v133 = vunpack.c.h.b16 %v112
  %v134 = vunpack.c.l.b16 %v113
  %v135 = vunpack.c.h.b16 %v113
  %v136 = vunpack.c.l.b16 %v114
  %v137 = vunpack.c.h.b16 %v114
  %v138 = vunpack.c.l.b16 %v115
  %v139 = vunpack.c.h.b16 %v115
  %v140 = vpack.c.b16 %v124, %v124
  %v141 = vpack.c.b16 %v125, %v125
  %v142 = vpack.c.b16 %v126, %v126
  %v143 = vpack.c.b16 %v127, %v127
  %v144 = vpack.c.b16 %v128, %v128
  %v145 = vpack.c.b16 %v129, %v129
  %v146 = vpack.c.b16 %v130, %v130
  %v147 = vpack.c.b16 %v131, %v131
  %v148 = vpack.c.b16 %v132, %v132
  %v149 = vpack.c.b16 %v133, %v133
  %v150 = vpack.c.b16 %v134, %v134
  %v151 = vpack.c.b16 %v135, %v135
  %v152 = vpack.c.b16 %v136, %v136
  %v153 = vpack.c.b16 %v137, %v137
  %v154 = vpack.c.b16 %v138, %v138
  %v155 = vpack.c.b16 %v139, %v139
  %172 = vst [vmem:[%s3] sm:$0xf] %v140
  %173 = vst [vmem:[%s3 + $0x4] sm:$0xf] %v141
  %174 = vst [vmem:[%s3 + $0x8] sm:$0xf] %v142
  %175 = vst [vmem:[%s3 + $0xc] sm:$0xf] %v143
  %176 = vst [vmem:[%s3 + $0x10] sm:$0xf] %v144
  %177 = vst [vmem:[%s3 + $0x14] sm:$0xf] %v145
  %178 = vst [vmem:[%s3 + $0x18] sm:$0xf] %v146
  %179 = vst [vmem:[%s3 + $0x1c] sm:$0xf] %v147
  %180 = vst [vmem:[%s3 + $0x20] sm:$0xf] %v148
  %181 = vst [vmem:[%s3 + $0x24] sm:$0xf] %v149
  %182 = vst [vmem:[%s3 + $0x28] sm:$0xf] %v150
  %183 = vst [vmem:[%s3 + $0x2c] sm:$0xf] %v151
  %184 = vst [vmem:[%s3 + $0x30] sm:$0xf] %v152
  %185 = vst [vmem:[%s3 + $0x34] sm:$0xf] %v153
  %186 = vst [vmem:[%s3 + $0x38] sm:$0xf] %v154
  %187 = vst [vmem:[%s3 + $0x3c] sm:$0xf] %v155
  // Predicated region
  $region14: #{conv_bn.3} parent=0 // pred_check
    _
  $region15: #{conv_bn.3} parent=0 // pred_check_branch
    %189 = sbr.rel (0) target = $region17
  $region16: #{conv_bn.3} parent=0 // pred_region
    _
  $region17: #{conv_bn.3} parent=0 // pred_fallthru
    _
  // Predicated region
  $region18: #{conv_bn.3} parent=0 // pred_check
    _
  $region19: #{conv_bn.3} parent=0 // pred_check_branch
    %191 = sbr.rel (0) target = $region21
  $region20: #{conv_bn.3} parent=0 // pred_region
    _
  $region21: #{conv_bn.3} parent=0 // pred_fallthru
    _

// kernel: conv_bn.2
$region0: #{conv_bn.2}
  #allocation0 [shape = 'u32[]', space=smem, size = 0x4, offset = 0x4, fixed_abs, tag = 'smem constant byte address 0x4 - core index']
  #allocation1 [shape = 'u32[144,128]{1,0:T(1,128)}', space=vmem, size = 0x12000, scoped, tag = 'internal scratch']
  #allocation2 [shape = 'f32[128,128]{1,0:T(8,128)}', space=vmem, size = 0x10000, scoped, tag = 'scratch operand']
  %s0 = inlined_call_operand.vmem [shape: bf16[128,128], index: 0, kind: input, shape index: {}]
  %s1 = inlined_call_operand.vmem [shape: bf16[128,128], index: 1, kind: input, shape index: {}]
  %s2 = inlined_call_operand.vmem [shape: bf16[128,128], index: 2, kind: output, shape index: {0}]
  %s3 = inlined_call_operand.vmem [shape: f32[8,128], index: 3, kind: output, shape index: {1}]
  %4 = xla_tuple %s2, %s3
  %s5 = sld [smem:[#allocation0]]
  $region34: #{conv_bn.2} parent=0
    _
  %s7 = ssub.s32 1, %s5
  %s8 = scalar_select 0, %s7, %s5
  // Predicated region
  $region2: #{conv_bn.2} parent=0 // pred_check
    _
  $region3: #{conv_bn.2} parent=0 // pred_check_branch
    %10 = sbr.rel (0) target = $region5
  $region4: #{conv_bn.2} parent=0 // pred_region
    _
  $region5: #{conv_bn.2} parent=0 // pred_fallthru
    _
  // Predicated region
  $region6: #{conv_bn.2} parent=0 // pred_check
    _
  $region7: #{conv_bn.2} parent=0 // pred_check_branch
    %12 = sbr.rel (0) target = $region9
  $region8: #{conv_bn.2} parent=0 // pred_region
    _
  $region9: #{conv_bn.2} parent=0 // pred_fallthru
    _
  %p14 = scmp.eq.s32.totalorder 0, 0
  // Predicated region
  $region10: #{conv_bn.2} parent=0 // pred_check
    %p15 = pneg %p14
  $region11: #{conv_bn.2} parent=0 // pred_check_branch
    %17 = sbr.rel (%p15) target = $region13
  $region12: #{conv_bn.2} parent=0 // pred_region
    %18 = vst [vmem:[#allocation2] sm:$0xff] 0.0
    %19 = vst [vmem:[#allocation2 + $0x8] sm:$0xff] 0.0
    %20 = vst [vmem:[#allocation2 + $0x10] sm:$0xff] 0.0
    %21 = vst [vmem:[#allocation2 + $0x18] sm:$0xff] 0.0
    %22 = vst [vmem:[#allocation2 + $0x20] sm:$0xff] 0.0
    %23 = vst [vmem:[#allocation2 + $0x28] sm:$0xff] 0.0
    %24 = vst [vmem:[#allocation2 + $0x30] sm:$0xff] 0.0
    %25 = vst [vmem:[#allocation2 + $0x38] sm:$0xff] 0.0
    %26 = vst [vmem:[#allocation2 + $0x40] sm:$0xff] 0.0
    %27 = vst [vmem:[#allocation2 + $0x48] sm:$0xff] 0.0
    %28 = vst [vmem:[#allocation2 + $0x50] sm:$0xff] 0.0
    %29 = vst [vmem:[#allocation2 + $0x58] sm:$0xff] 0.0
    %30 = vst [vmem:[#allocation2 + $0x60] sm:$0xff] 0.0
    %31 = vst [vmem:[#allocation2 + $0x68] sm:$0xff] 0.0
    %32 = vst [vmem:[#allocation2 + $0x70] sm:$0xff] 0.0
    %33 = vst [vmem:[#allocation2 + $0x78] sm:$0xff] 0.0
  $region13: #{conv_bn.2} parent=0 // pred_fallthru
    _
  %v34 = vld [vmem:[#allocation2] sm:$0xff]
  %v35 = vld [vmem:[#allocation2 + $0x8] sm:$0xff]
  %v36 = vld [vmem:[#allocation2 + $0x10] sm:$0xff]
  %v37 = vld [vmem:[#allocation2 + $0x18] sm:$0xff]
  %v38 = vld [vmem:[#allocation2 + $0x20] sm:$0xff]
  %v39 = vld [vmem:[#allocation2 + $0x28] sm:$0xff]
  %v40 = vld [vmem:[#allocation2 + $0x30] sm:$0xff]
  %v41 = vld [vmem:[#allocation2 + $0x38] sm:$0xff]
  %v42 = vld [vmem:[#allocation2 + $0x40] sm:$0xff]
  %v43 = vld [vmem:[#allocation2 + $0x48] sm:$0xff]
  %v44 = vld [vmem:[#allocation2 + $0x50] sm:$0xff]
  %v45 = vld [vmem:[#allocation2 + $0x58] sm:$0xff]
  %v46 = vld [vmem:[#allocation2 + $0x60] sm:$0xff]
  %v47 = vld [vmem:[#allocation2 + $0x68] sm:$0xff]
  %v48 = vld [vmem:[#allocation2 + $0x70] sm:$0xff]
  %v49 = vld [vmem:[#allocation2 + $0x78] sm:$0xff]
  %v50 = vld [vmem:[%s0] sm:$0xf]
  %v51 = vld [vmem:[%s0 + $0x4] sm:$0xf]
  %v52 = vld [vmem:[%s0 + $0x8] sm:$0xf]
  %v53 = vld [vmem:[%s0 + $0xc] sm:$0xf]
  %v54 = vld [vmem:[%s0 + $0x10] sm:$0xf]
  %v55 = vld [vmem:[%s0 + $0x14] sm:$0xf]
  %v56 = vld [vmem:[%s0 + $0x18] sm:$0xf]
  %v57 = vld [vmem:[%s0 + $0x1c] sm:$0xf]
  %v58 = vld [vmem:[%s0 + $0x20] sm:$0xf]
  %v59 = vld [vmem:[%s0 + $0x24] sm:$0xf]
  %v60 = vld [vmem:[%s0 + $0x28] sm:$0xf]
  %v61 = vld [vmem:[%s0 + $0x2c] sm:$0xf]
  %v62 = vld [vmem:[%s0 + $0x30] sm:$0xf]
  %v63 = vld [vmem:[%s0 + $0x34] sm:$0xf]
  %v64 = vld [vmem:[%s0 + $0x38] sm:$0xf]
  %v65 = vld [vmem:[%s0 + $0x3c] sm:$0xf]
  %v66 = vld [vmem:[%s1] sm:$0xf]
  %v67 = vld [vmem:[%s1 + $0x4] sm:$0xf]
  %v68 = vld [vmem:[%s1 + $0x8] sm:$0xf]
  %v69 = vld [vmem:[%s1 + $0xc] sm:$0xf]
  %v70 = vld [vmem:[%s1 + $0x10] sm:$0xf]
  %v71 = vld [vmem:[%s1 + $0x14] sm:$0xf]
  %v72 = vld [vmem:[%s1 + $0x18] sm:$0xf]
  %v73 = vld [vmem:[%s1 + $0x1c] sm:$0xf]
  %v74 = vld [vmem:[%s1 + $0x20] sm:$0xf]
  %v75 = vld [vmem:[%s1 + $0x24] sm:$0xf]
  %v76 = vld [vmem:[%s1 + $0x28] sm:$0xf]
  %v77 = vld [vmem:[%s1 + $0x2c] sm:$0xf]
  %v78 = vld [vmem:[%s1 + $0x30] sm:$0xf]
  %v79 = vld [vmem:[%s1 + $0x34] sm:$0xf]
  %v80 = vld [vmem:[%s1 + $0x38] sm:$0xf]
  %v81 = vld [vmem:[%s1 + $0x3c] sm:$0xf]
  %v98 = vunpack.c.l.b16 %v50
  %v99 = vunpack.c.l.b16 %v51
  %v100 = vunpack.c.l.b16 %v52
  %v101 = vunpack.c.l.b16 %v53
  %v102 = vunpack.c.l.b16 %v54
  %v103 = vunpack.c.l.b16 %v55
  %v104 = vunpack.c.l.b16 %v56
  %v105 = vunpack.c.l.b16 %v57
  %v106 = vunpack.c.l.b16 %v58
  %v107 = vunpack.c.l.b16 %v59
  %v108 = vunpack.c.l.b16 %v60
  %v109 = vunpack.c.l.b16 %v61
  %v110 = vunpack.c.l.b16 %v62
  %v111 = vunpack.c.l.b16 %v63
  %v112 = vunpack.c.l.b16 %v64
  %v113 = vunpack.c.l.b16 %v65
  %v114 = vpack.c.b16 %v99, %v98
  %v115 = vpack.c.b16 %v101, %v100
  %v116 = vpack.c.b16 %v103, %v102
  %v117 = vpack.c.b16 %v105, %v104
  %v118 = vpack.c.b16 %v107, %v106
  %v119 = vpack.c.b16 %v109, %v108
  %v120 = vpack.c.b16 %v111, %v110
  %v121 = vpack.c.b16 %v113, %v112
  %v146 = vunpack.c.l.b16 %v66
  %v147 = vunpack.c.l.b16 %v67
  %v148 = vunpack.c.l.b16 %v68
  %v149 = vunpack.c.l.b16 %v69
  %v150 = vunpack.c.l.b16 %v70
  %v151 = vunpack.c.l.b16 %v71
  %v152 = vunpack.c.l.b16 %v72
  %v153 = vunpack.c.l.b16 %v73
  %v154 = vunpack.c.l.b16 %v74
  %v155 = vunpack.c.l.b16 %v75
  %v156 = vunpack.c.l.b16 %v76
  %v157 = vunpack.c.l.b16 %v77
  %v158 = vunpack.c.l.b16 %v78
  %v159 = vunpack.c.l.b16 %v79
  %v160 = vunpack.c.l.b16 %v80
  %v161 = vunpack.c.l.b16 %v81
  %v162 = vpack.c.b16 %v147, %v146
  %v163 = vpack.c.b16 %v149, %v148
  %v164 = vpack.c.b16 %v151, %v150
  %v165 = vpack.c.b16 %v153, %v152
  %v166 = vpack.c.b16 %v155, %v154
  %v167 = vpack.c.b16 %v157, %v156
  %v168 = vpack.c.b16 %v159, %v158
  %v169 = vpack.c.b16 %v161, %v160
  %178 = vmatprep.subr.bf16.mxu0 0
  %179 = vmatpush1.bf16.msra.mxu0 %v169
  %180 = vmatprep.subr.bf16.mxu0 0
  %181 = vmatpush1.bf16.msra.mxu0 %v168
  %182 = vmatprep.subr.bf16.mxu0 0
  %183 = vmatpush1.bf16.msra.mxu0 %v167
  %184 = vmatprep.subr.bf16.mxu0 0
  %185 = vmatpush1.bf16.msra.mxu0 %v166
  %186 = vmatprep.subr.bf16.mxu0 0
  %187 = vmatpush1.bf16.msra.mxu0 %v165
  %188 = vmatprep.subr.bf16.mxu0 0
  %189 = vmatpush1.bf16.msra.mxu0 %v164
  %190 = vmatprep.subr.bf16.mxu0 0
  %191 = vmatpush1.bf16.msra.mxu0 %v163
  %192 = vmatprep.subr.bf16.mxu0 0
  %193 = vmatpush1.bf16.msra.mxu0 %v162
  %194 = vmatprep.subr.bf16.mxu0 0
  %195 = vmatpush2.bf16.msra.mxu0 0
  %196 = vmatprep.subr.bf16.mxu0 0
  %197 = vmatpush2.bf16.msra.mxu0 0
  %198 = vmatprep.subr.bf16.mxu0 0
  %199 = vmatpush2.bf16.msra.mxu0 0
  %200 = vmatprep.subr.bf16.mxu0 0
  %201 = vmatpush2.bf16.msra.mxu0 0
  %202 = vmatprep.subr.bf16.mxu0 0
  %203 = vmatpush2.bf16.msra.mxu0 0
  %204 = vmatprep.subr.bf16.mxu0 0
  %205 = vmatpush2.bf16.msra.mxu0 0
  %206 = vmatprep.subr.bf16.mxu0 0
  %207 = vmatpush2.bf16.msra.mxu0 0
  %208 = vmatprep.subr.bf16.mxu0 0
  %209 = vmatpush2.bf16.msra.mxu0 0
  %210 = vmatprep.mubr.bf16.mxu0 0
  %211 = vmatmul.mubr.bf16.gmra.mxu0 %v114
  %v212 = vpop.f32.mrf.mxu0
  %v213 = vadd.f32 0.0, %v212
  %v214 = vpop.f32.mrf.mxu0
  %v215 = vpop.f32.mrf.mxu0
  %v216 = vadd.f32 0.0, %v215
  %v217 = vpop.f32.mrf.mxu0
  %218 = vmatprep.mubr.bf16.mxu0 0
  %219 = vmatmul.mubr.bf16.gmra.mxu0 %v115
  %v220 = vpop.f32.mrf.mxu0
  %v221 = vadd.f32 0.0, %v220
  %v222 = vpop.f32.mrf.mxu0
  %v223 = vpop.f32.mrf.mxu0
  %v224 = vadd.f32 0.0, %v223
  %v225 = vpop.f32.mrf.mxu0
  %226 = vmatprep.mubr.bf16.mxu0 0
  %227 = vmatmul.mubr.bf16.gmra.mxu0 %v116
  %v228 = vpop.f32.mrf.mxu0
  %v229 = vadd.f32 0.0, %v228
  %v230 = vpop.f32.mrf.mxu0
  %v231 = vpop.f32.mrf.mxu0
  %v232 = vadd.f32 0.0, %v231
  %v233 = vpop.f32.mrf.mxu0
  %234 = vmatprep.mubr.bf16.mxu0 0
  %235 = vmatmul.mubr.bf16.gmra.mxu0 %v117
  %v236 = vpop.f32.mrf.mxu0
  %v237 = vadd.f32 0.0, %v236
  %v238 = vpop.f32.mrf.mxu0
  %v239 = vpop.f32.mrf.mxu0
  %v240 = vadd.f32 0.0, %v239
  %v241 = vpop.f32.mrf.mxu0
  %242 = vmatprep.mubr.bf16.mxu0 0
  %243 = vmatmul.mubr.bf16.gmra.mxu0 %v118
  %v244 = vpop.f32.mrf.mxu0
  %v245 = vadd.f32 0.0, %v244
  %v246 = vpop.f32.mrf.mxu0
  %v247 = vpop.f32.mrf.mxu0
  %v248 = vadd.f32 0.0, %v247
  %v249 = vpop.f32.mrf.mxu0
  %250 = vmatprep.mubr.bf16.mxu0 0
  %251 = vmatmul.mubr.bf16.gmra.mxu0 %v119
  %v252 = vpop.f32.mrf.mxu0
  %v253 = vadd.f32 0.0, %v252
  %v254 = vpop.f32.mrf.mxu0
  %v255 = vpop.f32.mrf.mxu0
  %v256 = vadd.f32 0.0, %v255
  %v257 = vpop.f32.mrf.mxu0
  %258 = vmatprep.mubr.bf16.mxu0 0
  %259 = vmatmul.mubr.bf16.gmra.mxu0 %v120
  %v260 = vpop.f32.mrf.mxu0
  %v261 = vadd.f32 0.0, %v260
  %v262 = vpop.f32.mrf.mxu0
  %v263 = vpop.f32.mrf.mxu0
  %v264 = vadd.f32 0.0, %v263
  %v265 = vpop.f32.mrf.mxu0
  %266 = vmatprep.mubr.bf16.mxu0 0
  %267 = vmatmul.mubr.bf16.gmra.mxu0 %v121
  %v268 = vpop.f32.mrf.mxu0
  %v269 = vadd.f32 0.0, %v268
  %v270 = vpop.f32.mrf.mxu0
  %v271 = vpop.f32.mrf.mxu0
  %v272 = vadd.f32 0.0, %v271
  %v273 = vpop.f32.mrf.mxu0
  %274 = vdwg.mxu0
  %v275 = vadd.f32 %v34, %v213
  %v276 = vadd.f32 %v35, %v216
  %v277 = vadd.f32 %v36, %v221
  %v278 = vadd.f32 %v37, %v224
  %v279 = vadd.f32 %v38, %v229
  %v280 = vadd.f32 %v39, %v232
  %v281 = vadd.f32 %v40, %v237
  %v282 = vadd.f32 %v41, %v240
  %v283 = vadd.f32 %v42, %v245
  %v284 = vadd.f32 %v43, %v248
  %v285 = vadd.f32 %v44, %v253
  %v286 = vadd.f32 %v45, %v256
  %v287 = vadd.f32 %v46, %v261
  %v288 = vadd.f32 %v47, %v264
  %v289 = vadd.f32 %v48, %v269
  %v290 = vadd.f32 %v49, %v272
  %291 = vst [vmem:[#allocation2] sm:$0xff] %v275
  %292 = vst [vmem:[#allocation2 + $0x8] sm:$0xff] %v276
  %293 = vst [vmem:[#allocation2 + $0x10] sm:$0xff] %v277
  %294 = vst [vmem:[#allocation2 + $0x18] sm:$0xff] %v278
  %295 = vst [vmem:[#allocation2 + $0x20] sm:$0xff] %v279
  %296 = vst [vmem:[#allocation2 + $0x28] sm:$0xff] %v280
  %297 = vst [vmem:[#allocation2 + $0x30] sm:$0xff] %v281
  %298 = vst [vmem:[#allocation2 + $0x38] sm:$0xff] %v282
  %299 = vst [vmem:[#allocation2 + $0x40] sm:$0xff] %v283
  %300 = vst [vmem:[#allocation2 + $0x48] sm:$0xff] %v284
  %301 = vst [vmem:[#allocation2 + $0x50] sm:$0xff] %v285
  %302 = vst [vmem:[#allocation2 + $0x58] sm:$0xff] %v286
  %303 = vst [vmem:[#allocation2 + $0x60] sm:$0xff] %v287
  %304 = vst [vmem:[#allocation2 + $0x68] sm:$0xff] %v288
  %305 = vst [vmem:[#allocation2 + $0x70] sm:$0xff] %v289
  %306 = vst [vmem:[#allocation2 + $0x78] sm:$0xff] %v290
  // Predicated region
  $region14: #{conv_bn.2} parent=0 // pred_check
    %p307 = pneg %p14
  $region15: #{conv_bn.2} parent=0 // pred_check_branch
    %309 = sbr.rel (%p307) target = $region17
  $region16: #{conv_bn.2} parent=0 // pred_region
    %v310 = vld [vmem:[#allocation2] sm:$0xff]
    %v311 = vld [vmem:[#allocation2 + $0x8] sm:$0xff]
    %v312 = vld [vmem:[#allocation2 + $0x10] sm:$0xff]
    %v313 = vld [vmem:[#allocation2 + $0x18] sm:$0xff]
    %v314 = vld [vmem:[#allocation2 + $0x20] sm:$0xff]
    %v315 = vld [vmem:[#allocation2 + $0x28] sm:$0xff]
    %v316 = vld [vmem:[#allocation2 + $0x30] sm:$0xff]
    %v317 = vld [vmem:[#allocation2 + $0x38] sm:$0xff]
    %v318 = vld [vmem:[#allocation2 + $0x40] sm:$0xff]
    %v319 = vld [vmem:[#allocation2 + $0x48] sm:$0xff]
    %v320 = vld [vmem:[#allocation2 + $0x50] sm:$0xff]
    %v321 = vld [vmem:[#allocation2 + $0x58] sm:$0xff]
    %v322 = vld [vmem:[#allocation2 + $0x60] sm:$0xff]
    %v323 = vld [vmem:[#allocation2 + $0x68] sm:$0xff]
    %v324 = vld [vmem:[#allocation2 + $0x70] sm:$0xff]
    %v325 = vld [vmem:[#allocation2 + $0x78] sm:$0xff]
    %v326 = vpack.c.bf16 %v311, %v310
    %v327 = vpack.c.bf16 %v313, %v312
    %v328 = vpack.c.bf16 %v315, %v314
    %v329 = vpack.c.bf16 %v317, %v316
    %v330 = vpack.c.bf16 %v319, %v318
    %v331 = vpack.c.bf16 %v321, %v320
    %v332 = vpack.c.bf16 %v323, %v322
    %v333 = vpack.c.bf16 %v325, %v324
    %v342 = vunpack.c.l.b16 %v326
    %v343 = vunpack.c.h.b16 %v326
    %v344 = vunpack.c.l.b16 %v327
    %v345 = vunpack.c.h.b16 %v327
    %v346 = vunpack.c.l.b16 %v328
    %v347 = vunpack.c.h.b16 %v328
    %v348 = vunpack.c.l.b16 %v329
    %v349 = vunpack.c.h.b16 %v329
    %v350 = vunpack.c.l.b16 %v330
    %v351 = vunpack.c.h.b16 %v330
    %v352 = vunpack.c.l.b16 %v331
    %v353 = vunpack.c.h.b16 %v331
    %v354 = vunpack.c.l.b16 %v332
    %v355 = vunpack.c.h.b16 %v332
    %v356 = vunpack.c.l.b16 %v333
    %v357 = vunpack.c.h.b16 %v333
    %v358 = vpack.c.b16 %v342, %v342
    %v359 = vpack.c.b16 %v343, %v343
    %v360 = vpack.c.b16 %v344, %v344
    %v361 = vpack.c.b16 %v345, %v345
    %v362 = vpack.c.b16 %v346, %v346
    %v363 = vpack.c.b16 %v347, %v347
    %v364 = vpack.c.b16 %v348, %v348
    %v365 = vpack.c.b16 %v349, %v349
    %v366 = vpack.c.b16 %v350, %v350
    %v367 = vpack.c.b16 %v351, %v351
    %v368 = vpack.c.b16 %v352, %v352
    %v369 = vpack.c.b16 %v353, %v353
    %v370 = vpack.c.b16 %v354, %v354
    %v371 = vpack.c.b16 %v355, %v355
    %v372 = vpack.c.b16 %v356, %v356
    %v373 = vpack.c.b16 %v357, %v357
    %390 = vst [vmem:[%s2] sm:$0xf] %v358
    %391 = vst [vmem:[%s2 + $0x4] sm:$0xf] %v359
    %392 = vst [vmem:[%s2 + $0x8] sm:$0xf] %v360
    %393 = vst [vmem:[%s2 + $0xc] sm:$0xf] %v361
    %394 = vst [vmem:[%s2 + $0x10] sm:$0xf] %v362
    %395 = vst [vmem:[%s2 + $0x14] sm:$0xf] %v363
    %396 = vst [vmem:[%s2 + $0x18] sm:$0xf] %v364
    %397 = vst [vmem:[%s2 + $0x1c] sm:$0xf] %v365
    %398 = vst [vmem:[%s2 + $0x20] sm:$0xf] %v366
    %399 = vst [vmem:[%s2 + $0x24] sm:$0xf] %v367
    %400 = vst [vmem:[%s2 + $0x28] sm:$0xf] %v368
    %401 = vst [vmem:[%s2 + $0x2c] sm:$0xf] %v369
    %402 = vst [vmem:[%s2 + $0x30] sm:$0xf] %v370
    %403 = vst [vmem:[%s2 + $0x34] sm:$0xf] %v371
    %404 = vst [vmem:[%s2 + $0x38] sm:$0xf] %v372
    %405 = vst [vmem:[%s2 + $0x3c] sm:$0xf] %v373
    %v406 = vadd.f32 %v310, %v311
    %v407 = vadd.f32 %v406, %v312
    %v408 = vadd.f32 %v407, %v313
    %v409 = vadd.f32 %v408, %v314
    %v410 = vadd.f32 %v409, %v315
    %v411 = vadd.f32 %v410, %v316
    %v412 = vadd.f32 %v411, %v317
    %v413 = vadd.f32 %v412, %v318
    %v414 = vadd.f32 %v413, %v319
    %v415 = vadd.f32 %v414, %v320
    %v416 = vadd.f32 %v415, %v321
    %v417 = vadd.f32 %v416, %v322
    %v418 = vadd.f32 %v417, %v323
    %v419 = vadd.f32 %v418, %v324
    %v420 = vadd.f32 %v419, %v325
    %v421 = vrot.slane %v420, 4
    %v422 = vadd.f32 %v420, %v421
    %v423 = vrot.slane %v422, 2
    %v424 = vadd.f32 %v422, %v423
    %v425 = vrot.slane %v424, 1
    %v426 = vadd.f32 %v424, %v425
    %v427 = vmul.f32 %v310, %v310
    %v428 = vmul.f32 %v311, %v311
    %v429 = vmul.f32 %v312, %v312
    %v430 = vmul.f32 %v313, %v313
    %v431 = vmul.f32 %v314, %v314
    %v432 = vmul.f32 %v315, %v315
    %v433 = vmul.f32 %v316, %v316
    %v434 = vmul.f32 %v317, %v317
    %v435 = vmul.f32 %v318, %v318
    %v436 = vmul.f32 %v319, %v319
    %v437 = vmul.f32 %v320, %v320
    %v438 = vmul.f32 %v321, %v321
    %v439 = vmul.f32 %v322, %v322
    %v440 = vmul.f32 %v323, %v323
    %v441 = vmul.f32 %v324, %v324
    %v442 = vmul.f32 %v325, %v325
    %v443 = vadd.f32 %v427, %v428
    %v444 = vadd.f32 %v443, %v429
    %v445 = vadd.f32 %v444, %v430
    %v446 = vadd.f32 %v445, %v431
    %v447 = vadd.f32 %v446, %v432
    %v448 = vadd.f32 %v447, %v433
    %v449 = vadd.f32 %v448, %v434
    %v450 = vadd.f32 %v449, %v435
    %v451 = vadd.f32 %v450, %v436
    %v452 = vadd.f32 %v451, %v437
    %v453 = vadd.f32 %v452, %v438
    %v454 = vadd.f32 %v453, %v439
    %v455 = vadd.f32 %v454, %v440
    %v456 = vadd.f32 %v455, %v441
    %v457 = vadd.f32 %v456, %v442
    %v458 = vrot.slane %v457, 4
    %v459 = vadd.f32 %v457, %v458
    %v460 = vrot.slane %v459, 2
    %v461 = vadd.f32 %v459, %v460
    %v462 = vrot.slane %v461, 1
    %v463 = vadd.f32 %v461, %v462
    %v464 = vlaneseq
    %v465 = vshrl.u32 %v464, 7
    %vm466 = vcmp.eq.s32.totalorder %v465, 0
    %v467 = vsel %vm466, %v426, 0.0
    %vm468 = vcmp.eq.s32.totalorder %v465, 1
    %v469 = vsel %vm468, %v463, 0.0
    %v470 = vadd.f32 %v467, %v469
    %471 = vst [vmem:[%s3] sm:$0xff] %v470
  $region17: #{conv_bn.2} parent=0 // pred_fallthru
    _
  // Predicated region
  $region18: #{conv_bn.2} parent=0 // pred_check
    _
  $region19: #{conv_bn.2} parent=0 // pred_check_branch
    %473 = sbr.rel (0) target = $region21
  $region20: #{conv_bn.2} parent=0 // pred_region
    _
  $region21: #{conv_bn.2} parent=0 // pred_fallthru
    _
  // Predicated region
  $region22: #{conv_bn.2} parent=0 // pred_check
    _
  $region23: #{conv_bn.2} parent=0 // pred_check_branch
    %475 = sbr.rel (0) target = $region25
  $region24: #{conv_bn.2} parent=0 // pred_region
    _
  $region25: #{conv_bn.2} parent=0 // pred_fallthru
    _
  // Predicated region
  $region26: #{conv_bn.2} parent=0 // pred_check
    _
  $region27: #{conv_bn.2} parent=0 // pred_check_branch
    %477 = sbr.rel (0) target = $region29
  $region28: #{conv_bn.2} parent=0 // pred_region
    _
  $region29: #{conv_bn.2} parent=0 // pred_fallthru
    _
  // Predicated region
  $region30: #{conv_bn.2} parent=0 // pred_check
    _
  $region31: #{conv_bn.2} parent=0 // pred_check_branch
    %479 = sbr.rel (0) target = $region33
  $region32: #{conv_bn.2} parent=0 // pred_region
    _
  $region33: #{conv_bn.2} parent=0 // pred_fallthru
    _

</llo_original>
